<compile_context>
chip_gen: v5e
topology: v5e:2x2
jax: 0.10.0
libtpu: 0.0.40
codegen_flags: <defaults>
</compile_context>

<pallas_src>
import functools

import jax
import jax.numpy as jnp
from jax.experimental import pallas as pl
from jax.experimental.pallas import tpu as pltpu


# 48 MiB scoped VMEM: above the 16/32 MiB defaults (v5e/v6e), below v7x's 64 MiB
# physical so double-buffering keeps headroom on every generation.
_VMEM_LIMIT = 48 * 1024 * 1024


# ----------------------------------------------------------------------------
# GCN step 1: fts = seq @ W^T  (small matmul, own pipelined kernel)
# ----------------------------------------------------------------------------
def _fts_kernel(seq_ref, w_ref, fts_ref):
    # seq_ref: (1, TM, F_in)   w_ref: (F_in, F_out)   fts_ref: (1, TM, F_out)
    seq = seq_ref[0].astype(jnp.float32)
    w = w_ref[...].astype(jnp.float32)
    fts = jnp.dot(seq, w, preferred_element_type=jnp.float32)
    fts_ref[0] = fts.astype(fts_ref.dtype)


def _compute_fts(seq, w_t, out_dtype, tile_m):
    B, N, F_in = seq.shape
    F_out = w_t.shape[1]
    tm = N if N <= tile_m else tile_m
    nm = pl.cdiv(N, tm)
    cost = pl.CostEstimate(
        flops=2 * B * N * F_in * F_out,
        transcendentals=0,
        bytes_accessed=(B * N * F_in * seq.dtype.itemsize
                        + F_in * F_out * 4
                        + B * N * F_out * jnp.dtype(out_dtype).itemsize))
    return pl.pallas_call(
        _fts_kernel,
        out_shape=jax.ShapeDtypeStruct((B, N, F_out), out_dtype),
        grid=(B, nm),
        in_specs=[
            pl.BlockSpec((1, tm, F_in), lambda b, m: (b, m, 0)),
            pl.BlockSpec((F_in, F_out), lambda b, m: (0, 0)),
        ],
        out_specs=pl.BlockSpec((1, tm, F_out), lambda b, m: (b, m, 0)),
        compiler_params=pltpu.CompilerParams(
            dimension_semantics=("parallel", "parallel"),
            vmem_limit_bytes=_VMEM_LIMIT),
        cost_estimate=cost,
    )(seq, w_t)


# ----------------------------------------------------------------------------
# GCN step 2: out = prelu(adj @ fts + bias), tiled (B, M, K) with f32 accumulator
# ----------------------------------------------------------------------------
def _gcn_spatial_kernel(alpha_ref, adj_ref, fts_ref, bias_ref, out_ref, acc_ref):
    # alpha_ref: SMEM (1,)          PReLU slope
    # adj_ref:   VMEM (1, TM, TK)
    # fts_ref:   VMEM (1, TK, F_out)   (K dim zero-padded in the wrapper)
    # bias_ref:  VMEM (1, F_out)
    # out_ref:   VMEM (1, TM, F_out)
    # acc_ref:   VMEM (TM, F_out) f32 scratch accumulator
    k = pl.program_id(2)

    @pl.when(k == 0)
    def _():
        acc_ref[...] = jnp.zeros_like(acc_ref)

    acc_ref[...] += jnp.dot(adj_ref[0], fts_ref[0],
                            preferred_element_type=jnp.float32)

    @pl.when(k == pl.num_programs(2) - 1)
    def _():
        out = acc_ref[...] + bias_ref[...].astype(jnp.float32)
        alpha = alpha_ref[0]
        out = jnp.where(out >= 0, out, alpha * out)          # PReLU
        out_ref[0] = out.astype(out_ref.dtype)


def _gcn_readout_kernel(n_nodes, tile_m,
                        alpha_ref, adj_ref, fts_ref, bias_ref, csum_ref, acc_ref):
    # Same as _gcn_spatial_kernel, but instead of writing (TM, F_out) rows it
    # accumulates a masked column-sum into csum_ref (1, 1, F_out) -> AvgReadout is
    # fused and h is never written to HBM.
    m = pl.program_id(1)
    k = pl.program_id(2)

    @pl.when(jnp.logical_and(m == 0, k == 0))
    def _():
        csum_ref[...] = jnp.zeros_like(csum_ref)

    @pl.when(k == 0)
    def _():
        acc_ref[...] = jnp.zeros_like(acc_ref)

    acc_ref[...] += jnp.dot(adj_ref[0], fts_ref[0],
                            preferred_element_type=jnp.float32)

    @pl.when(k == pl.num_programs(2) - 1)
    def _():
        out = acc_ref[...] + bias_ref[...].astype(jnp.float32)
        alpha = alpha_ref[0]
        out = jnp.where(out >= 0, out, alpha * out)          # PReLU
        # Mask rows past the real node count (tail M-tile padding).
        row = m * tile_m + jax.lax.broadcasted_iota(jnp.int32, out.shape, 0)
        out = jnp.where(row < n_nodes, out, 0.0)
        csum_ref[0] = csum_ref[0] + jnp.sum(out, axis=0, keepdims=True)


def gcn_forward(seq, adj, fc_weight, gcn_bias, prelu_alpha, *,
                out_dtype=None, fuse_readout=False, tile_m=256, tile_k=256):
    """Pallas equivalent of GCN_DGI.forward (dense adjacency, sparse=False).

    seq: (B, N, F_in); adj: (B, N, N) (its dtype sets the MXU compute dtype);
    fc_weight: (F_out, F_in) torch layout.
    If fuse_readout=True, returns mean over nodes (B, F_out) in f32 instead of
    the full (B, N, F_out) activation.
    Tiles are 256-aligned (MXU-friendly on v5e/v6e/v7x); F_out is left unpadded
    (Mosaic pads lanes internally).
    """
    # TODO(synk): the sparse=True torch.spmm path (sparse adjacency) has no clean
    #             Pallas equivalent here; only the dense bmm path is implemented.
    B, N, F_in = seq.shape
    F_out = fc_weight.shape[0]
    cdt = adj.dtype
    if out_dtype is None:
        out_dtype = cdt

    w_t = jnp.asarray(fc_weight, jnp.float32).T                   # (F_in, F_out)
    bias2d = jnp.asarray(gcn_bias, jnp.float32).reshape(1, F_out)
    alpha = jnp.asarray(prelu_alpha, jnp.float32).reshape(1)

    # Step 1: fts = seq @ W^T, emitted in the adjacency's (compute) dtype.
    fts = _compute_fts(seq, w_t, cdt, tile_m)

    # Step 2: tiled adj @ fts.
    tm = N if N <= tile_m else tile_m
    tk = N if N <= tile_k else tile_k
    nm = pl.cdiv(N, tm)
    nk = pl.cdiv(N, tk)
    n_kpad = nk * tk
    if n_kpad != N:
        # Zero-pad the contraction dim so garbage adj columns in the K-tail block
        # multiply exact zeros (fts is small: B*N*F_out).
        fts = jnp.pad(fts, ((0, 0), (0, n_kpad - N), (0, 0)))

    adj_isz = jnp.dtype(adj.dtype).itemsize
    fts_isz = jnp.dtype(fts.dtype).itemsize
    out_bytes = (B * F_out * 4) if fuse_readout else (B * N * F_out *
                                                      jnp.dtype(out_dtype).itemsize)
    cost = pl.CostEstimate(
        flops=2 * B * N * n_kpad * F_out,
        transcendentals=0,
        bytes_accessed=(B * N * N * adj_isz + B * n_kpad * F_out * fts_isz
                        + F_out * 4 + out_bytes))

    in_specs = [
        pl.BlockSpec(memory_space=pltpu.SMEM),                      # PReLU alpha (1,)
        pl.BlockSpec((1, tm, tk), lambda b, m, k: (b, m, k)),       # adj tile
        pl.BlockSpec((1, tk, F_out), lambda b, m, k: (b, k, 0)),    # fts K-tile
        pl.BlockSpec((1, F_out), lambda b, m, k: (0, 0)),           # bias
    ]
    scratch = [pltpu.VMEM((tm, F_out), jnp.float32)]

    if fuse_readout:
        csum = pl.pallas_call(
            functools.partial(_gcn_readout_kernel, N, tm),
            out_shape=jax.ShapeDtypeStruct((B, 1, F_out), jnp.float32),
            grid=(B, nm, nk),
            in_specs=in_specs,
            out_specs=pl.BlockSpec((1, 1, F_out), lambda b, m, k: (b, 0, 0)),
            scratch_shapes=scratch,
            compiler_params=pltpu.CompilerParams(
                dimension_semantics=("parallel", "arbitrary", "arbitrary"),
                vmem_limit_bytes=_VMEM_LIMIT),
            cost_estimate=cost,
        )(alpha, adj, fts, bias2d)
        return csum[:, 0, :] * (1.0 / N)                            # mean over nodes

    return pl.pallas_call(
        _gcn_spatial_kernel,
        out_shape=jax.ShapeDtypeStruct((B, N, F_out), out_dtype),
        grid=(B, nm, nk),
        in_specs=in_specs,
        out_specs=pl.BlockSpec((1, tm, F_out), lambda b, m, k: (b, m, 0)),
        scratch_shapes=scratch,
        compiler_params=pltpu.CompilerParams(
            dimension_semantics=("parallel", "parallel", "arbitrary"),
            vmem_limit_bytes=_VMEM_LIMIT),
        cost_estimate=cost,
    )(alpha, adj, fts, bias2d)


# ----------------------------------------------------------------------------
# Discriminator (nn.Bilinear(n_h, n_h, 1)) kernel
# ----------------------------------------------------------------------------
def _disc_kernel(bias_ref, u_ref, hpl_ref, hmi_ref, sc1_ref, sc2_ref):
    # bias_ref: SMEM (1,)                 Bilinear bias (already scaled by caller)
    # u_ref:    VMEM (1, 1, n_h)          u[b] = W @ c[b]  (precomputed outside)
    # hpl_ref:  VMEM (1, TILE_N, n_h)     positive node embeddings tile
    # hmi_ref:  VMEM (1, TILE_N, n_h)     negative node embeddings tile
    # sc1_ref:  VMEM (1, 1, TILE_N)       lane-dense scores (positive)
    # sc2_ref:  VMEM (1, 1, TILE_N)       lane-dense scores (negative)
    bias = bias_ref[0]
    u = u_ref[0].astype(jnp.float32)          # (1, n_h)
    hpl = hpl_ref[0].astype(jnp.float32)      # (TILE_N, n_h)
    hmi = hmi_ref[0].astype(jnp.float32)      # (TILE_N, n_h)

    # VPU multiply + cross-lane reduce (no per-row MXU matvec).
    sc1 = jnp.sum(hpl * u, axis=-1) + bias    # (TILE_N,)
    sc2 = jnp.sum(hmi * u, axis=-1) + bias    # (TILE_N,)

    sc1_ref[0] = sc1[None, :].astype(sc1_ref.dtype)
    sc2_ref[0] = sc2[None, :].astype(sc2_ref.dtype)


def discriminator_forward(c, h_pl, h_mi, weight, bias,
                          s_bias1=None, s_bias2=None, tile_n=1024):
    """Pallas equivalent of Discriminator.forward.

    c:      (B, n_h) f32        summary vector per graph
    h_pl:   (B, N, n_h)         positive node embeddings (f32 or bf16)
    h_mi:   (B, N, n_h)         negative node embeddings
    weight: (1, n_h, n_h)       PyTorch nn.Bilinear weight
    bias:   (1,)                PyTorch nn.Bilinear bias
    returns logits (B, 2N) f32
    """
    B, N, n_h = h_pl.shape

    # Hoist the tiny (B,n_h)x(n_h,n_h) matmul out of the kernel: u[b] = W @ c[b].
    u = jnp.einsum('bj,ij->bi', c.astype(jnp.float32),
                   weight[0].astype(jnp.float32)).reshape(B, 1, n_h)

    tile = N if N <= tile_n else tile_n
    nt = pl.cdiv(N, tile)

    itemsize = jnp.dtype(h_pl.dtype).itemsize
    cost = pl.CostEstimate(
        flops=4 * B * N * n_h,
        transcendentals=0,
        bytes_accessed=2 * B * N * n_h * itemsize + (B * n_h + 2 * B * N) * 4)

    sc1, sc2 = pl.pallas_call(
        _disc_kernel,
        out_shape=(jax.ShapeDtypeStruct((B, 1, N), jnp.float32),
                   jax.ShapeDtypeStruct((B, 1, N), jnp.float32)),
        grid=(B, nt),
        in_specs=[
            pl.BlockSpec(memory_space=pltpu.SMEM),                    # bias (1,)
            pl.BlockSpec((1, 1, n_h), lambda b, n: (b, 0, 0)),        # u
            pl.BlockSpec((1, tile, n_h), lambda b, n: (b, n, 0)),     # h_pl
            pl.BlockSpec((1, tile, n_h), lambda b, n: (b, n, 0)),     # h_mi
        ],
        out_specs=(
            pl.BlockSpec((1, 1, tile), lambda b, n: (b, 0, n)),       # sc1
            pl.BlockSpec((1, 1, tile), lambda b, n: (b, 0, n)),       # sc2
        ),
        compiler_params=pltpu.CompilerParams(
            dimension_semantics=("parallel", "parallel"),
            vmem_limit_bytes=_VMEM_LIMIT),
        cost_estimate=cost,
    )(jnp.asarray(bias, jnp.float32).reshape(1), u, h_pl, h_mi)

    sc1 = sc1[:, 0, :]
    sc2 = sc2[:, 0, :]
    if s_bias1 is not None:
        sc1 = sc1 + s_bias1
    if s_bias2 is not None:
        sc2 = sc2 + s_bias2
    return jnp.concatenate([sc1, sc2], axis=1)


# ----------------------------------------------------------------------------
# Readout + full DGI forward (composition glue in plain JAX)
# ----------------------------------------------------------------------------
def avg_readout(seq, msk):
    seq = seq.astype(jnp.float32)
    if msk is None:
        return jnp.mean(seq, axis=1)
    m = msk[..., None]
    return jnp.sum(seq * m, axis=1) / jnp.sum(m)


def dgi_forward(params, seq1, seq2, seq3, seq4, adj, aug_adj1, aug_adj2,
                sparse, msk, samp_bias1, samp_bias2, aug_type,
                h_dtype=jnp.bfloat16, tile_m=256, tile_k=256, tile_n=1024):
    assert not sparse, "sparse torch.spmm path not implemented"
    cdt = jnp.dtype(h_dtype)
    # Heavy tensors (adj, fts, h) stream in h_dtype; all accumulation stays f32.
    adj_c = adj.astype(cdt)
    aug1_c = aug_adj1.astype(cdt)
    aug2_c = aug_adj2.astype(cdt)

    gcn = functools.partial(gcn_forward, fc_weight=params['fc_w'],
                            gcn_bias=params['gcn_b'], prelu_alpha=params['prelu'],
                            tile_m=tile_m, tile_k=tile_k)

    # h_0 / h_2 are consumed row-wise by the discriminator -> materialize (h_dtype).
    h_0 = gcn(seq1, adj_c)
    h_2 = gcn(seq2, adj_c)

    if aug_type == 'edge':
        in1, a1, in3, a3 = seq1, aug1_c, seq1, aug2_c
    elif aug_type == 'mask':
        in1, a1, in3, a3 = seq3, adj_c, seq4, adj_c
    elif aug_type in ('node', 'subgraph'):
        in1, a1, in3, a3 = seq3, aug1_c, seq4, aug2_c
    else:
        assert False

    if msk is None:
        # h_1 / h_3 only feed a mean-over-nodes -> fused readout, no HBM writeback.
        c_1 = jax.nn.sigmoid(gcn(in1, a1, fuse_readout=True))
        c_3 = jax.nn.sigmoid(gcn(in3, a3, fuse_readout=True))
    else:
        h_1 = gcn(in1, a1)
        h_3 = gcn(in3, a3)
        c_1 = jax.nn.sigmoid(avg_readout(h_1, msk))
        c_3 = jax.nn.sigmoid(avg_readout(h_3, msk))

    # ret1 + ret2 is linear in the summary vector through u = W @ c, so both
    # discriminator calls collapse into a single pass over h_0 / h_2 with
    # c = c_1 + c_3 and doubled biases.
    sb1 = None if samp_bias1 is None else 2.0 * samp_bias1
    sb2 = None if samp_bias2 is None else 2.0 * samp_bias2
    bias2 = 2.0 * jnp.asarray(params['disc_b'], jnp.float32)
    return discriminator_forward(c_1 + c_3, h_0, h_2, params['disc_w'], bias2,
                                 sb1, sb2, tile_n=tile_n)


# ----------------------------------------------------------------------------
# Pure-JAX reference (mirrors the PyTorch module)
# ----------------------------------------------------------------------------
_HI = jax.lax.Precision.HIGHEST


def _ref_gcn(seq, adj, fc_w, b, alpha):
    fts = jnp.einsum('bnf,hf->bnh', seq, fc_w, precision=_HI)
    out = jnp.einsum('bnm,bmh->bnh', adj, fts, precision=_HI) + b
    return jnp.where(out >= 0, out, alpha[0] * out)


def _ref_disc(c, h_pl, h_mi, w, b):
    W = w[0]
    u = jnp.einsum('bj,ij->bi', c, W, precision=_HI)
    sc1 = jnp.einsum('bni,bi->bn', h_pl, u, precision=_HI) + b[0]
    sc2 = jnp.einsum('bni,bi->bn', h_mi, u, precision=_HI) + b[0]
    return jnp.concatenate([sc1, sc2], axis=1)


def _ref_dgi(params, seq1, seq2, seq3, seq4, adj, aug_adj1, aug_adj2,
             sparse, msk, samp_bias1, samp_bias2, aug_type):
    gcn = lambda s, a: _ref_gcn(s, a, params['fc_w'], params['gcn_b'], params['prelu'])
    h_0 = gcn(seq1, adj)
    if aug_type == 'edge':
        h_1, h_3 = gcn(seq1, aug_adj1), gcn(seq1, aug_adj2)
    elif aug_type == 'mask':
        h_1, h_3 = gcn(seq3, adj), gcn(seq4, adj)
    else:
        h_1, h_3 = gcn(seq3, aug_adj1), gcn(seq4, aug_adj2)
    c_1 = jax.nn.sigmoid(avg_readout(h_1, msk))
    c_3 = jax.nn.sigmoid(avg_readout(h_3, msk))
    h_2 = gcn(seq2, adj)
    ret1 = _ref_disc(c_1, h_0, h_2, params['disc_w'], params['disc_b'])
    ret2 = _ref_disc(c_3, h_0, h_2, params['disc_w'], params['disc_b'])
    return ret1 + ret2


# ----------------------------------------------------------------------------
if __name__ == "__main__":
    key = jax.random.PRNGKey(0)
    B, N, n_in, n_h = 2, 8, 16, 32

    ks = jax.random.split(key, 9)
    seq1 = jax.random.normal(ks[0], (B, N, n_in), jnp.float32)
    seq2 = jax.random.normal(ks[1], (B, N, n_in), jnp.float32)
    seq3 = jax.random.normal(ks[2], (B, N, n_in), jnp.float32)
    seq4 = jax.random.normal(ks[3], (B, N, n_in), jnp.float32)
    adj = jax.random.uniform(ks[4], (B, N, N), jnp.float32)
    aug_adj1 = jax.random.uniform(ks[5], (B, N, N), jnp.float32)
    aug_adj2 = jax.random.uniform(ks[6], (B, N, N), jnp.float32)

    # GCN_DGI params: xavier_uniform-style fc weight, zero bias, PReLU init 0.25.
    bound_fc = (6.0 / (n_in + n_h)) ** 0.5
    fc_w = jax.random.uniform(ks[7], (n_h, n_in), jnp.float32, -bound_fc, bound_fc)
    gcn_b = jnp.zeros((n_h,), jnp.float32)
    prelu = jnp.array([0.25], jnp.float32)

    # Discriminator (nn.Bilinear) params: xavier_uniform-style weight, zero bias.
    bound_bi = (6.0 / (n_h + n_h)) ** 0.5
    disc_w = jax.random.uniform(ks[8], (1, n_h, n_h), jnp.float32, -bound_bi, bound_bi)
    disc_b = jnp.zeros((1,), jnp.float32)

    params = dict(fc_w=fc_w, gcn_b=gcn_b, prelu=prelu, disc_w=disc_w, disc_b=disc_b)

    args = (seq1, seq2, seq3, seq4, adj, aug_adj1, aug_adj2)
    kwargs = dict(sparse=False, msk=None, samp_bias1=None, samp_bias2=None,
                  aug_type='edge')

    ref = _ref_dgi(params, *args, False, None, None, None, 'edge')

    # Exact-semantics path (f32 storage) -- tight check.
    out_f32 = dgi_forward(params, *args, h_dtype=jnp.float32, **kwargs)
    out_f32 = jax.block_until_ready(out_f32)
    assert out_f32.shape == (B, 2 * N)
    assert jnp.allclose(out_f32, ref, atol=1e-2, rtol=1e-2)

    # Bandwidth-optimized path (bf16 adj / fts / h, f32 accumulation) -- loose check.
    out_bf16 = dgi_forward(params, *args, h_dtype=jnp.bfloat16, **kwargs)
    out_bf16 = jax.block_until_ready(out_bf16)
    assert out_bf16.shape == (B, 2 * N)
    assert jnp.allclose(out_bf16, ref, atol=2.5e-1, rtol=5e-2)

    print("KERNEL_OK")
</pallas_src>

<mosaic_0001>
module attributes {stable_mosaic.version = 11 : i64} {
  func.func @_fts_kernel(%arg0: i32, %arg1: i32, %arg2: memref<1x8x16xf32, #tpu.memory_space<vmem>>, %arg3: memref<16x32xf32, #tpu.memory_space<vmem>>, %arg4: memref<1x8x32xf32, #tpu.memory_space<vmem>>) attributes {dimension_semantics = [#tpu.dimension_semantics<parallel>, #tpu.dimension_semantics<parallel>], iteration_bounds = array<i64: 2, 1>, scalar_prefetch = 0 : i64, scratch_operands = 0 : i64, tpu.core_type = #tpu.core_type<tc>, window_params = [{transform_indices = @transform_0, window_bounds = array<i64: 1, 8, 16>}, {pipeline_mode = #tpu.pipeline_mode<synchronous>, transform_indices = @transform_1, window_bounds = array<i64: 16, 32>}, {transform_indices = @transform_2, window_bounds = array<i64: 1, 8, 32>}]} {
    %c0 = arith.constant 0 : index
    %c0_0 = arith.constant 0 : index
    %c0_1 = arith.constant 0 : index
    %0 = vector.load %arg2[%c0, %c0_0, %c0_1] : memref<1x8x16xf32, #tpu.memory_space<vmem>>, vector<1x8x16xf32>
    %1 = vector.shape_cast %0 : vector<1x8x16xf32> to vector<8x16xf32>
    %c0_2 = arith.constant 0 : index
    %c0_3 = arith.constant 0 : index
    %2 = vector.load %arg3[%c0_2, %c0_3] : memref<16x32xf32, #tpu.memory_space<vmem>>, vector<16x32xf32>
    %cst = arith.constant dense<0.000000e+00> : vector<8x32xf32>
    %3 = tpu.matmul %1, %2, %cst {dimension_numbers = #tpu.dot_dimension_numbers<[1], [0], [0], [1], [0, 0, 1, 1], [], []>} : vector<8x16xf32>, vector<16x32xf32>, vector<8x32xf32> -> vector<8x32xf32>
    %c0_4 = arith.constant 0 : index
    %c0_5 = arith.constant 0 : index
    %c0_6 = arith.constant 0 : index
    %4 = vector.load %arg4[%c0_4, %c0_5, %c0_6] : memref<1x8x32xf32, #tpu.memory_space<vmem>>, vector<1x8x32xf32>
    %5 = vector.shape_cast %4 : vector<1x8x32xf32> to vector<8x32xf32>
    %6 = vector.shape_cast %3 : vector<8x32xf32> to vector<1x8x32xf32>
    tpu.vector_store %arg4[%c0_4, %c0_5, %c0_6], %6 {strides = array<i32>} : memref<1x8x32xf32, #tpu.memory_space<vmem>>, vector<1x8x32xf32>,
    return
  }
  func.func @transform_0(%arg0: i32, %arg1: i32) -> (i32, i32, i32) {
    %c0_i32 = arith.constant 0 : i32
    %c0_i32_0 = arith.constant 0 : i32
    return %arg0, %arg1, %c0_i32 : i32, i32, i32
  }
  func.func @transform_1(%arg0: i32, %arg1: i32) -> (i32, i32) {
    %c0_i32 = arith.constant 0 : i32
    %c0_i32_0 = arith.constant 0 : i32
    %c0_i32_1 = arith.constant 0 : i32
    return %c0_i32, %c0_i32_0 : i32, i32
  }
  func.func @transform_2(%arg0: i32, %arg1: i32) -> (i32, i32, i32) {
    %c0_i32 = arith.constant 0 : i32
    %c0_i32_0 = arith.constant 0 : i32
    return %arg0, %arg1, %c0_i32 : i32, i32, i32
  }
}

</mosaic_0001>

<llo_original>
// kernel: tpu_custom_call.1
$region0: #{tpu_custom_call.1}
  #allocation0 [shape = 'u32[]', space=smem, size = 0x4, offset = 0x4, fixed_abs, tag = 'smem constant byte address 0x4 - core index']
  #allocation1 [shape = 'u32[72,128]{1,0:T(1,128)}', space=vmem, size = 0x9000, scoped, tag = 'internal scratch']
  %s0 = inlined_call_operand.hbm [shape: f32[2,8,16], index: 0, kind: input, shape index: {}]
  %s1 = inlined_call_operand.hbm [shape: f32[16,32], index: 1, kind: input, shape index: {}]
  %s2 = inlined_call_operand.hbm [shape: f32[2,8,32], index: 2, kind: output, shape index: {}]
  %s3 = sld [smem:[#allocation0]]
  $region49: #{tpu_custom_call.1} parent=0
    _
  %s5 = ssub.s32 1, %s3
  %s6 = scalar_select 0, %s5, %s3
  $region1: #{tpu_custom_call.1} parent=0
    #allocation2 [shape = 'u8[8192]{0}', space=vmem, size = 0x2000, scoped, tag = 'input window, operand 0']
    #allocation3 [shape = 's32[2]{0}', space=sflag, size = 0x8, scoped, tag = 'scoped memory for tpu_custom_call.1']
    #allocation4 [shape = 's32[2]{0}', space=sflag, size = 0x8, scoped, tag = 'scoped memory for tpu_custom_call.1']
    #allocation5 [shape = 'u8[8192]{0}', space=vmem, size = 0x2000, scoped, tag = 'input window, operand 1, single buffered']
    #allocation6 [shape = 's32[1]{0}', space=sflag, size = 0x4, scoped, tag = 'scoped memory for tpu_custom_call.1']
    #allocation7 [shape = 'u8[8192]{0}', space=vmem, size = 0x2000, scoped, tag = 'output window, operand 0']
    %7 = vsyncpa [#allocation3], 0
    %s8 = scalar_lea.sflag [#allocation3], 1
    %9 = vsyncpa %s8, 0
    %10 = vsyncpa [#allocation6], 0
    %11 = vsyncpa [#allocation4], 0
    %s12 = scalar_lea.sflag [#allocation4], 1
    %13 = vsyncpa %s12, 0
    loop: start=0, step=1, limit=4
    $region2: #{tpu_custom_call.1} parent=1 // loop_pre_header
      _
    $region3: #{tpu_custom_call.1} parent=1 // loop_header
      %s15 = sphi 0, %s19
      %p16 = scmp.ge.s32.totalorder %s15, 4
      %s22 = sphi 0, %s34
      %s23 = sphi 0, %s30
      %s24 = sphi 0, %s22
      %s25 = sphi 0, %s23
      %s26 = sphi 0, %s24
      %s27 = sphi 0, %s25
      %s39 = sphi 0, %s41
      %s42 = sphi 0, %s39
      %s43 = sphi 0, %s42
      %s59 = sphi 0, %s43
      %s63 = sphi 0, %s63
      %s65 = sphi 0, %s63
      %s66 = sphi 0, %s65
      %s80 = sphi 0, %s66
      %s88 = sphi 0, %s90
      %s91 = sphi 0, %s88
      %s92 = sphi 0, %s91
      %s108 = sphi 0, %s92
    $region4: #{tpu_custom_call.1} parent=1 // loop_header_branch
      %18 = sbr.rel (%p16) target = $region8
    $region5: #{tpu_custom_call.1} parent=1 // loop_body
      %s20 = ssub.s32 %s15, 1
      %s21 = ssub.s32 %s15, 2
      %s28 = sadd.s32 1, %s23
      %p29 = scmp.ge.s32.totalorder %s28, 1
      %s30 = scalar_select %p29, 0, %s28
      %s31 = sadd.s32 1, %s22
      %s32 = scalar_select %p29, %s31, %s22
      %p33 = scmp.ge.s32.totalorder %s32, 2
      %s34 = scalar_select %p33, 0, %s32
      %s35 = ssub.s32 %s22, %s34
      %s36 = ssub.s32 %s23, %s30
      %s37 = sor.u32 %s35, %s36
      %p38 = scmp.eq.s32.totalorder %s37, 0
      %s40 = sadd.s32 %s39, 1
      %s41 = scalar_select %p38, %s39, %s40
      %p44 = pneg %p38
      %p45 = scmp.eq.s32.totalorder %s15, 1
      %p46 = por %p44, %p45
      %p47 = scmp.ne.s32.totalorder %s39, %s42
      %p48 = scmp.eq.s32.totalorder %s15, 0
      %p49 = por %p47, %p48
      %p50 = scmp.ne.s32.totalorder %s39, %s42
      %p51 = scmp.eq.s32.totalorder %s20, 1
      %p52 = por %p50, %p51
      %p53 = scmp.ne.s32.totalorder %s42, %s43
      %p54 = scmp.eq.s32.totalorder %s20, 0
      %p55 = por %p53, %p54
      %p56 = scmp.ne.s32.totalorder %s42, %s43
      %p57 = scmp.eq.s32.totalorder %s21, 1
      %p58 = por %p56, %p57
      %p60 = scmp.ne.s32.totalorder %s43, %s59
      %p61 = scmp.eq.s32.totalorder %s21, 0
      %p62 = por %p60, %p61
      %s64 = sadd.s32 %s63, 1
      %p67 = scmp.eq.s32.totalorder %s15, 1
      %p68 = scmp.ne.s32.totalorder %s63, %s65
      %p69 = scmp.eq.s32.totalorder %s15, 0
      %p70 = por %p68, %p69
      %p71 = scmp.ne.s32.totalorder %s63, %s65
      %p72 = scmp.eq.s32.totalorder %s20, 1
      %p73 = por %p71, %p72
      %p74 = scmp.ne.s32.totalorder %s65, %s66
      %p75 = scmp.eq.s32.totalorder %s20, 0
      %p76 = por %p74, %p75
      %p77 = scmp.ne.s32.totalorder %s65, %s66
      %p78 = scmp.eq.s32.totalorder %s21, 1
      %p79 = por %p77, %p78
      %p81 = scmp.ne.s32.totalorder %s66, %s80
      %p82 = scmp.eq.s32.totalorder %s21, 0
      %p83 = por %p81, %p82
      %s84 = ssub.s32 %s22, %s34
      %s85 = ssub.s32 %s23, %s30
      %s86 = sor.u32 %s84, %s85
      %p87 = scmp.eq.s32.totalorder %s86, 0
      %s89 = sadd.s32 %s88, 1
      %s90 = scalar_select %p87, %s88, %s89
      %p93 = pneg %p87
      %p94 = scmp.eq.s32.totalorder %s15, 1
      %p95 = por %p93, %p94
      %p96 = scmp.ne.s32.totalorder %s88, %s91
      %p97 = scmp.eq.s32.totalorder %s15, 0
      %p98 = por %p96, %p97
      %p99 = scmp.ne.s32.totalorder %s88, %s91
      %p100 = scmp.eq.s32.totalorder %s20, 1
      %p101 = por %p99, %p100
      %p102 = scmp.ne.s32.totalorder %s91, %s92
      %p103 = scmp.eq.s32.totalorder %s20, 0
      %p104 = por %p102, %p103
      %p105 = scmp.ne.s32.totalorder %s91, %s92
      %p106 = scmp.eq.s32.totalorder %s21, 1
      %p107 = por %p105, %p106
      %p109 = scmp.ne.s32.totalorder %s92, %s108
      %p110 = scmp.eq.s32.totalorder %s21, 0
      %p111 = por %p109, %p110
      %p112 = scmp.le.s32.totalorder 1, %s15
      %p113 = scmp.lt.s32.totalorder %s15, 3
      %p114 = pnand %p112, %p113
      %p115 = pneg %p114
      // Predicated region
      $region9: #{tpu_custom_call.1} parent=5 // pred_check
        _
      $region10: #{tpu_custom_call.1} parent=5 // pred_check_branch
        %117 = sbr.rel (%p114) target = $region12
      $region11: #{tpu_custom_call.1} parent=5 // pred_region
        %s118 = ssub.s32 %s15, 1
        // Predicated region
        $region13: #{tpu_custom_call.1} parent=11 // pred_check
          %p119 = pneg %p76
        $region14: #{tpu_custom_call.1} parent=11 // pred_check_branch
          %121 = sbr.rel (%p119) target = $region16
        $region15: #{tpu_custom_call.1} parent=11 // pred_region
          %123 = vsyncadd [#allocation6], 0
          %s124 = sshll.u32 %s1, 4
          %s125 = int_to_ptr.hbm [resolvable:$true] %s124
          %s126 = sshll.u32 [#allocation5], 4
          %s127 = int_to_ptr.vmem [resolvable:$true] %s126
          %132 = dma.hbm_to_vmem [thread:$0]  %s125, 256, %s127, [#allocation6], 128, 128, 8
        $region16: #{tpu_custom_call.1} parent=11 // pred_fallthru
          _
      $region12: #{tpu_custom_call.1} parent=5 // pred_fallthru
        _
      %p133 = scmp.lt.s32.totalorder %s15, 2
      // Predicated region
      $region17: #{tpu_custom_call.1} parent=5 // pred_check
        %p134 = pneg %p133
      $region18: #{tpu_custom_call.1} parent=5 // pred_check_branch
        %136 = sbr.rel (%p134) target = $region20
      $region19: #{tpu_custom_call.1} parent=5 // pred_region
        // Predicated region
        $region21: #{tpu_custom_call.1} parent=19 // pred_check
          %p137 = pneg %p49
        $region22: #{tpu_custom_call.1} parent=19 // pred_check_branch
          %139 = sbr.rel (%p137) target = $region24
        $region23: #{tpu_custom_call.1} parent=19 // pred_region
          %s140 = sand.u32 %s39, 1
          %s141 = scalar_lea.sflag [#allocation3], %s140
          %s142 = sand.u32 %s39, 1
          %s143 = smul.addr %s142, 8
          %s144 = scalar_lea.vmem [#allocation2], %s143
          %146 = vsyncadd %s141, 0
          %s147 = sadd.s32 %s23, %s22
          %s148 = smul.addr %s147, 8
          %s149 = scalar_lea.hbm %s0, %s148
          %s151 = sshll.u32 %s149, 4
          %s152 = int_to_ptr.hbm [resolvable:$true] %s151
          %s153 = sshll.u32 %s144, 4
          %s154 = int_to_ptr.vmem [resolvable:$true] %s153
          %156 = dma.hbm_to_vmem [thread:$0]  %s152, 128, %s154, %s141
        $region24: #{tpu_custom_call.1} parent=19 // pred_fallthru
          _
      $region20: #{tpu_custom_call.1} parent=5 // pred_fallthru
        _
      %p157 = scmp.le.s32.totalorder 1, %s15
      %p158 = scmp.lt.s32.totalorder %s15, 3
      %p159 = pnand %p157, %p158
      %p160 = pneg %p159
      // Predicated region
      $region25: #{tpu_custom_call.1} parent=5 // pred_check
        _
      $region26: #{tpu_custom_call.1} parent=5 // pred_check_branch
        %162 = sbr.rel (%p159) target = $region28
      $region27: #{tpu_custom_call.1} parent=5 // pred_region
        %s163 = ssub.s32 %s15, 1
        %s164 = sand.u32 %s42, 1
        %s165 = scalar_lea.sflag [#allocation3], %s164
        %s166 = sand.u32 %s42, 1
        %s167 = smul.addr %s166, 8
        %s168 = scalar_lea.vmem [#allocation2], %s167
        // Predicated region
        $region29: #{tpu_custom_call.1} parent=27 // pred_check
          %p169 = pneg %p55
        $region30: #{tpu_custom_call.1} parent=27 // pred_check_branch
          %171 = sbr.rel (%p169) target = $region32
        $region31: #{tpu_custom_call.1} parent=27 // pred_region
          %173 = dma.done %s165, 128
        $region32: #{tpu_custom_call.1} parent=27 // pred_fallthru
          _
        // Predicated region
        $region33: #{tpu_custom_call.1} parent=27 // pred_check
          %p174 = pneg %p76
        $region34: #{tpu_custom_call.1} parent=27 // pred_check_branch
          %176 = sbr.rel (%p174) target = $region36
        $region35: #{tpu_custom_call.1} parent=27 // pred_region
          %178 = dma.done [#allocation6], 256
        $region36: #{tpu_custom_call.1} parent=27 // pred_fallthru
          _
        %s179 = sand.u32 %s42, 1
        %s180 = scalar_lea.sflag [#allocation3], %s179
        %s181 = sand.u32 %s42, 1
        %s182 = smul.addr %s181, 8
        %s183 = scalar_lea.vmem [#allocation2], %s182
        %p184 = pneg %p55
        %p185 = pneg %p52
        %p186 = pneg %p76
        %p187 = pneg %p73
        %p188 = pneg %p104
        %p189 = pneg %p101
        %s190 = sand.u32 %s91, 1
        %s191 = scalar_lea.sflag [#allocation4], %s190
        %s192 = sand.u32 %s91, 1
        %s193 = smul.addr %s192, 8
        %s194 = scalar_lea.vmem [#allocation7], %s193
        %v195 = vld [vmem:[%s168] sm:$0xff]
        %v196 = vld [vmem:[#allocation5] sm:$0xff]
        %v197 = vld [vmem:[#allocation5 + $0x8] sm:$0xff]
        %vm198 = vcmask 130048
        %v200 = vsel %vm198, %v195, 0
        %202 = vmatpush.msra.mxu0 0.0
        %203 = vmatpush.msra.mxu0 0.0
        %204 = vmatpush.msra.mxu0 0.0
        %205 = vmatpush.msra.mxu0 0.0
        %206 = vmatpush.msra.mxu0 0.0
        %207 = vmatpush.msra.mxu0 0.0
        %208 = vmatpush.msra.mxu0 0.0
        %209 = vmatpush.msra.mxu0 0.0
        %210 = vmatpush.msra.mxu0 0.0
        %211 = vmatpush.msra.mxu0 0.0
        %212 = vmatpush.msra.mxu0 0.0
        %213 = vmatpush.msra.mxu0 0.0
        %214 = vmatpush.msra.mxu0 0.0
        %215 = vmatpush.msra.mxu0 0.0
        %216 = vmatpush.msra.mxu0 %v197
        %217 = vmatpush.msra.mxu0 %v196
        %218 = vmatmul.f32.gmra.mxu0 %v200
        %v219 = vpop.f32.mrf.mxu0
        %v220 = vadd.f32 0.0, %v219
        %221 = vdwg.mxu0
        %vm222 = vcmask 261120
        %223 = vst.msk [vmem:[%s194] sm:$0xff] %vm222, %v220
        %s224 = sand.u32 %s91, 1
        %s225 = scalar_lea.sflag [#allocation4], %s224
        %s226 = sand.u32 %s91, 1
        %s227 = smul.addr %s226, 8
        %s228 = scalar_lea.vmem [#allocation7], %s227
        // Predicated region
        $region37: #{tpu_custom_call.1} parent=27 // pred_check
          %p229 = pneg %p101
        $region38: #{tpu_custom_call.1} parent=27 // pred_check_branch
          %231 = sbr.rel (%p229) target = $region40
        $region39: #{tpu_custom_call.1} parent=27 // pred_region
          %233 = vsyncadd %s225, 0
          %s234 = sadd.s32 %s25, %s24
          %s235 = smul.addr %s234, 8
          %s236 = scalar_lea.hbm %s2, %s235
          %s238 = sshll.u32 %s228, 4
          %s239 = int_to_ptr.vmem [resolvable:$true] %s238
          %s240 = sshll.u32 %s236, 4
          %s241 = int_to_ptr.hbm [resolvable:$true] %s240
          %243 = dma.vmem_to_hbm [thread:$0]  %s239, 128, %s241, %s225
        $region40: #{tpu_custom_call.1} parent=27 // pred_fallthru
          _
      $region28: #{tpu_custom_call.1} parent=5 // pred_fallthru
        _
      %p244 = scmp.le.s32.totalorder 2, %s15
      // Predicated region
      $region41: #{tpu_custom_call.1} parent=5 // pred_check
        %p245 = pneg %p244
      $region42: #{tpu_custom_call.1} parent=5 // pred_check_branch
        %247 = sbr.rel (%p245) target = $region44
      $region43: #{tpu_custom_call.1} parent=5 // pred_region
        %s248 = ssub.s32 %s15, 2
        // Predicated region
        $region45: #{tpu_custom_call.1} parent=43 // pred_check
          %p249 = pneg %p107
        $region46: #{tpu_custom_call.1} parent=43 // pred_check_branch
          %251 = sbr.rel (%p249) target = $region48
        $region47: #{tpu_custom_call.1} parent=43 // pred_region
          %s252 = sand.u32 %s92, 1
          %s253 = scalar_lea.sflag [#allocation4], %s252
          %s254 = sand.u32 %s92, 1
          %s255 = smul.addr %s254, 8
          %s256 = scalar_lea.vmem [#allocation7], %s255
          %258 = dma.done %s253, 128
        $region48: #{tpu_custom_call.1} parent=43 // pred_fallthru
          _
      $region44: #{tpu_custom_call.1} parent=5 // pred_fallthru
        _
    $region6: #{tpu_custom_call.1} parent=1 // loop_footer
      %s19 = sadd.s32 1, %s15
    $region7: #{tpu_custom_call.1} parent=1 // loop_footer_branch
      %14 = sbr.rel target = $region3
    $region8: #{tpu_custom_call.1} parent=1 // loop_exit
      _
    %259 = vsyncpa [#allocation3], 1
    %s260 = scalar_lea.sflag [#allocation3], 1
    %261 = vsyncpa %s260, 1
    %262 = vsyncpa [#allocation6], 1
    %263 = vsyncpa [#allocation4], 1
    %s264 = scalar_lea.sflag [#allocation4], 1
    %265 = vsyncpa %s264, 1

</llo_original>
